<compile_context>
chip_gen: v5e
topology: v5e:2x2
jax: 0.10.0
libtpu: 0.0.40
codegen_flags: <defaults>
</compile_context>

<pallas_src>
import functools

import jax
import jax.numpy as jnp
from jax.experimental import pallas as pl
from jax.experimental.pallas import tpu as pltpu


def _round_up(x, m):
    return ((x + m - 1) // m) * m


def _linear_kernel(h_ref, w_ref, *rest, activation, has_bias):
    """One (i, j) output tile, reducing over the k grid axis.

    Refs (in order): h, W^T, [bias], z (pre-activation / buffer), [out].
    z is accumulated in-place in f32 (resident across k).  The activated
    output is only materialized when an activation is requested.
    """
    if has_bias:
        b_ref, *outs = rest
    else:
        b_ref, outs = None, list(rest)
    z_ref = outs[0]
    out_ref = outs[1] if activation is not None else None

    k = pl.program_id(2)

    @pl.when(k == 0)
    def _():
        if has_bias:
            z_ref[...] = jnp.broadcast_to(
                b_ref[...].astype(jnp.float32), z_ref.shape
            )
        else:
            z_ref[...] = jnp.zeros_like(z_ref)

    # Accumulate directly into the resident f32 output block (no scratch).
    z_ref[...] += jnp.dot(
        h_ref[...], w_ref[...], preferred_element_type=jnp.float32
    )

    if activation is not None:
        @pl.when(k == pl.num_programs(2) - 1)
        def _():
            z = z_ref[...]
            if activation == "relu":
                a = jnp.maximum(z, 0.0)
            elif activation == "sigmoid":
                a = jax.nn.sigmoid(z)
            else:
                raise ValueError(f"unsupported activation: {activation}")
            out_ref[...] = a.astype(out_ref.dtype)


def linear_layer_forward(h, weight_t, bias=None, *, activation=None,
                         tm=None, tn=None, tk=None):
    """Pallas forward for LinearLayer.forward_clean.

    h:        [M, K]  float32
    weight_t: [K, N]  float32  (PyTorch weight [N, K] transposed)
    bias:     [1, N]  float32 or None (module default bias=False -> None)
    activation: None | "relu" | "sigmoid"

    Returns (out, buffer) where buffer is the pre-activation z (self.buffer).
    When activation is None, out and buffer are the same array (no duplicate
    HBM writeback).
    """
    M, K = h.shape
    K2, N = weight_t.shape
    assert K == K2, (K, K2)
    has_bias = bias is not None

    # Adaptive tile selection: large tiles for MXU occupancy / step-overhead
    # amortization, clamped to the (HW-tile-rounded) problem size.
    if tm is None:
        tm = min(256, _round_up(M, 8))
    if tn is None:
        tn = min(512, _round_up(N, 128))
    if tk is None:
        tk = min(512, _round_up(K, 128))

    Mp, Np, Kp = _round_up(M, tm), _round_up(N, tn), _round_up(K, tk)

    # Zero-pad to tile multiples (zero rows/cols don't change the result;
    # padded output rows/cols are sliced off below).
    hp = h if (Mp == M and Kp == K) else jnp.pad(h, ((0, Mp - M), (0, Kp - K)))
    wp = (weight_t if (Kp == K and Np == N)
          else jnp.pad(weight_t, ((0, Kp - K), (0, Np - N))))

    args = [hp, wp]
    in_specs = [
        pl.BlockSpec((tm, tk), lambda i, j, k: (i, k)),   # h
        pl.BlockSpec((tk, tn), lambda i, j, k: (k, j)),   # W^T
    ]
    if has_bias:
        b = bias.reshape(1, N).astype(jnp.float32)
        bp = b if Np == N else jnp.pad(b, ((0, 0), (0, Np - N)))
        args.append(bp)
        in_specs.append(pl.BlockSpec((1, tn), lambda i, j, k: (0, j)))

    # z (pre-activation buffer) is always f32 and accumulated in place.
    out_shapes = [jax.ShapeDtypeStruct((Mp, Np), jnp.float32)]
    out_specs = [pl.BlockSpec((tm, tn), lambda i, j, k: (i, j))]
    if activation is not None:
        out_shapes.append(jax.ShapeDtypeStruct((Mp, Np), h.dtype))
        out_specs.append(pl.BlockSpec((tm, tn), lambda i, j, k: (i, j)))

    kernel = functools.partial(
        _linear_kernel, activation=activation, has_bias=has_bias
    )

    results = pl.pallas_call(
        kernel,
        out_shape=tuple(out_shapes),
        grid_spec=pltpu.PrefetchScalarGridSpec(
            num_scalar_prefetch=0,
            grid=(Mp // tm, Np // tn, Kp // tk),
            in_specs=in_specs,
            out_specs=out_specs,
        ),
        compiler_params=pltpu.CompilerParams(
            dimension_semantics=("parallel", "parallel", "arbitrary"),
            # Explicit scoped-VMEM budget so big tiles compile on v5e/v6e/v7x;
            # the working set at tm=256/tn=512/tk=512 f32 is ~5 MiB, well
            # under the ~48 MiB v7x headroom target.
            vmem_limit_bytes=48 * 1024 * 1024,
        ),
    )(*args)

    if activation is None:
        z = results[0][:M, :N]
        return z, z                      # out and buffer are the same array
    else:
        z, out = results
        return out[:M, :N], z[:M, :N]


def xavier_uniform(key, d_out, d_in, dtype=jnp.float32):
    """torch.nn.init.xavier_uniform_ for a [d_out, d_in] weight (gain=1)."""
    limit = jnp.sqrt(6.0 / (d_in + d_out))
    return jax.random.uniform(key, (d_out, d_in), dtype, -limit, limit)


if __name__ == "__main__":
    # TODO(synk): forward_noisy's numpy-Gaussian noise is host-side RNG; only
    # the clean path (forward_clean) is implemented in the kernel.
    key = jax.random.PRNGKey(0)
    k_h, k_w, k_h2, k_w2 = jax.random.split(key, 4)

    # --- Case 1: module defaults (bias=False, activation=None), aligned shapes.
    batch, d_in, d_out = 8, 128, 128
    h = jax.random.normal(k_h, (batch, d_in), jnp.float32)
    weight = xavier_uniform(k_w, d_out, d_in)       # PyTorch [d_out, d_in]
    out, buffer = linear_layer_forward(h, weight.T, bias=None, activation=None)
    out = jax.block_until_ready(out)
    buffer = jax.block_until_ready(buffer)

    z_ref = h @ weight.T
    assert jnp.allclose(buffer, z_ref, atol=1e-5, rtol=1e-5)
    assert jnp.allclose(out, z_ref, atol=1e-5, rtol=1e-5)

    # --- Case 2: bias=True, relu activation, non-tile-aligned shapes (padding path).
    batch2, d_in2, d_out2 = 8, 100, 72
    h2 = jax.random.normal(k_h2, (batch2, d_in2), jnp.float32)
    weight2 = xavier_uniform(k_w2, d_out2, d_in2)
    bias2 = jnp.full((1, d_out2), 0.01, jnp.float32)  # bias.data.fill_(0.01)
    out2, buffer2 = linear_layer_forward(h2, weight2.T, bias2, activation="relu")
    out2 = jax.block_until_ready(out2)
    buffer2 = jax.block_until_ready(buffer2)

    z_ref2 = h2 @ weight2.T + bias2
    a_ref2 = jnp.maximum(z_ref2, 0.0)
    assert jnp.allclose(buffer2, z_ref2, atol=1e-5, rtol=1e-5)
    assert jnp.allclose(out2, a_ref2, atol=1e-5, rtol=1e-5)

    print("KERNEL_OK")
</pallas_src>

<mosaic_0001>
module attributes {stable_mosaic.version = 11 : i64} {
  func.func @_linear_kernel(%arg0: i32, %arg1: i32, %arg2: i32, %arg3: memref<8x128xf32, #tpu.memory_space<vmem>>, %arg4: memref<128x128xf32, #tpu.memory_space<vmem>>, %arg5: memref<8x128xf32, #tpu.memory_space<vmem>>) attributes {dimension_semantics = [#tpu.dimension_semantics<parallel>, #tpu.dimension_semantics<parallel>, #tpu.dimension_semantics<arbitrary>], iteration_bounds = array<i64: 1, 1, 1>, scalar_prefetch = 0 : i64, scratch_operands = 0 : i64, tpu.core_type = #tpu.core_type<tc>, window_params = [{transform_indices = @transform_0, window_bounds = array<i64: 8, 128>}, {transform_indices = @transform_1, window_bounds = array<i64: 128, 128>}, {transform_indices = @transform_2, window_bounds = array<i64: 8, 128>}]} {
    %c0_i32 = arith.constant 0 : i32
    %0 = arith.cmpi eq, %arg2, %c0_i32 : i32
    %1 = arith.extui %0 : i1 to i32
    %c0_i32_0 = arith.constant 0 : i32
    %2 = arith.cmpi ne, %1, %c0_i32_0 : i32
    scf.if %2 {
      %cst_8 = arith.constant 0.000000e+00 : f32
      %9 = vector.broadcast %cst_8 : f32 to vector<8x128xf32>
      %c0_9 = arith.constant 0 : index
      %c0_10 = arith.constant 0 : index
      %10 = vector.load %arg5[%c0_9, %c0_10] : memref<8x128xf32, #tpu.memory_space<vmem>>, vector<8x128xf32>
      tpu.vector_store %arg5[%c0_9, %c0_10], %9 {strides = array<i32>} : memref<8x128xf32, #tpu.memory_space<vmem>>, vector<8x128xf32>,
    } else {
    }
    %c0 = arith.constant 0 : index
    %c0_1 = arith.constant 0 : index
    %3 = vector.load %arg5[%c0, %c0_1] : memref<8x128xf32, #tpu.memory_space<vmem>>, vector<8x128xf32>
    %c0_2 = arith.constant 0 : index
    %c0_3 = arith.constant 0 : index
    %4 = vector.load %arg3[%c0_2, %c0_3] : memref<8x128xf32, #tpu.memory_space<vmem>>, vector<8x128xf32>
    %c0_4 = arith.constant 0 : index
    %c0_5 = arith.constant 0 : index
    %5 = vector.load %arg4[%c0_4, %c0_5] : memref<128x128xf32, #tpu.memory_space<vmem>>, vector<128x128xf32>
    %cst = arith.constant dense<0.000000e+00> : vector<8x128xf32>
    %6 = tpu.matmul %4, %5, %cst {dimension_numbers = #tpu.dot_dimension_numbers<[1], [0], [0], [1], [0, 0, 1, 1], [], []>} : vector<8x128xf32>, vector<128x128xf32>, vector<8x128xf32> -> vector<8x128xf32>
    %7 = arith.addf %3, %6 : vector<8x128xf32>
    %c0_6 = arith.constant 0 : index
    %c0_7 = arith.constant 0 : index
    %8 = vector.load %arg5[%c0_6, %c0_7] : memref<8x128xf32, #tpu.memory_space<vmem>>, vector<8x128xf32>
    tpu.vector_store %arg5[%c0_6, %c0_7], %7 {strides = array<i32>} : memref<8x128xf32, #tpu.memory_space<vmem>>, vector<8x128xf32>,
    return
  }
  func.func @transform_0(%arg0: i32, %arg1: i32, %arg2: i32) -> (i32, i32) {
    %c0_i32 = arith.constant 0 : i32
    return %arg0, %arg2 : i32, i32
  }
  func.func @transform_1(%arg0: i32, %arg1: i32, %arg2: i32) -> (i32, i32) {
    %c0_i32 = arith.constant 0 : i32
    return %arg2, %arg1 : i32, i32
  }
  func.func @transform_2(%arg0: i32, %arg1: i32, %arg2: i32) -> (i32, i32) {
    %c0_i32 = arith.constant 0 : i32
    return %arg0, %arg1 : i32, i32
  }
}

</mosaic_0001>

<llo_original>
// kernel: tpu_custom_call.1
$region0: #{tpu_custom_call.1}
  #allocation0 [shape = 'u32[]', space=smem, size = 0x4, offset = 0x4, fixed_abs, tag = 'smem constant byte address 0x4 - core index']
  #allocation1 [shape = 'u32[72,128]{1,0:T(1,128)}', space=vmem, size = 0x9000, scoped, tag = 'internal scratch']
  %s0 = inlined_call_operand.hbm [shape: f32[8,128], index: 0, kind: input, shape index: {}]
  %s1 = inlined_call_operand.hbm [shape: f32[128,128], index: 1, kind: input, shape index: {}]
  %s2 = inlined_call_operand.hbm [shape: f32[8,128], index: 2, kind: output, shape index: {}]
  %s3 = sld [smem:[#allocation0]]
  $region30: #{tpu_custom_call.1} parent=0
    _
  %s5 = ssub.s32 1, %s3
  %s6 = scalar_select 0, %s5, %s3
  $region1: #{tpu_custom_call.1} parent=0
    #allocation2 [shape = 'u8[4096]{0}', space=vmem, size = 0x1000, scoped, tag = 'input window, operand 0, single buffered']
    #allocation3 [shape = 's32[1]{0}', space=sflag, size = 0x4, scoped, tag = 'scoped memory for tpu_custom_call.1']
    #allocation4 [shape = 's32[1]{0}', space=sflag, size = 0x4, scoped, tag = 'scoped memory for tpu_custom_call.1']
    #allocation5 [shape = 'u8[65536]{0}', space=vmem, size = 0x10000, scoped, tag = 'input window, operand 1, single buffered']
    #allocation6 [shape = 's32[1]{0}', space=sflag, size = 0x4, scoped, tag = 'scoped memory for tpu_custom_call.1']
    #allocation7 [shape = 'u8[4096]{0}', space=vmem, size = 0x1000, scoped, tag = 'output window, operand 0, single buffered']
    %7 = vsyncpa [#allocation3], 0
    %8 = vsyncpa [#allocation6], 0
    %9 = vsyncpa [#allocation4], 0
    // Predicated region
    $region2: #{tpu_custom_call.1} parent=1 // pred_check
      _
    $region3: #{tpu_custom_call.1} parent=1 // pred_check_branch
      %11 = sbr.rel (0) target = $region5
    $region4: #{tpu_custom_call.1} parent=1 // pred_region
      %13 = vsyncadd [#allocation3], 0
      %s15 = sshll.u32 %s0, 4
      %s16 = int_to_ptr.hbm [resolvable:$true] %s15
      %s17 = sshll.u32 [#allocation2], 4
      %s18 = int_to_ptr.vmem [resolvable:$true] %s17
      %20 = dma.hbm_to_vmem [thread:$0]  %s16, 128, %s18, [#allocation3]
    $region5: #{tpu_custom_call.1} parent=1 // pred_fallthru
      _
    // Predicated region
    $region6: #{tpu_custom_call.1} parent=1 // pred_check
      _
    $region7: #{tpu_custom_call.1} parent=1 // pred_check_branch
      %22 = sbr.rel (0) target = $region9
    $region8: #{tpu_custom_call.1} parent=1 // pred_region
      %24 = vsyncadd [#allocation6], 0
      %s25 = sshll.u32 %s1, 4
      %s26 = int_to_ptr.hbm [resolvable:$true] %s25
      %s27 = sshll.u32 [#allocation5], 4
      %s28 = int_to_ptr.vmem [resolvable:$true] %s27
      %33 = dma.hbm_to_vmem [thread:$0]  %s26, 2048, %s28, [#allocation6], 128, 128, 8
    $region9: #{tpu_custom_call.1} parent=1 // pred_fallthru
      _
    // Predicated region
    $region10: #{tpu_custom_call.1} parent=1 // pred_check
      _
    $region11: #{tpu_custom_call.1} parent=1 // pred_check_branch
      %35 = sbr.rel (0) target = $region13
    $region12: #{tpu_custom_call.1} parent=1 // pred_region
      %37 = dma.done [#allocation3], 128
    $region13: #{tpu_custom_call.1} parent=1 // pred_fallthru
      _
    // Predicated region
    $region14: #{tpu_custom_call.1} parent=1 // pred_check
      _
    $region15: #{tpu_custom_call.1} parent=1 // pred_check_branch
      %39 = sbr.rel (0) target = $region17
    $region16: #{tpu_custom_call.1} parent=1 // pred_region
      %41 = dma.done [#allocation6], 2048
    $region17: #{tpu_custom_call.1} parent=1 // pred_fallthru
      _
    %p42 = scmp.eq.s32.totalorder 0, 0
    // Predicated region
    $region18: #{tpu_custom_call.1} parent=1 // pred_check
      %p43 = pneg %p42
    $region19: #{tpu_custom_call.1} parent=1 // pred_check_branch
      %45 = sbr.rel (%p43) target = $region21
    $region20: #{tpu_custom_call.1} parent=1 // pred_region
      %46 = vst [vmem:[#allocation7] sm:$0xff] 0.0
    $region21: #{tpu_custom_call.1} parent=1 // pred_fallthru
      _
    %v47 = vld [vmem:[#allocation7] sm:$0xff]
    %v48 = vld [vmem:[#allocation2] sm:$0xff]
    %v49 = vld [vmem:[#allocation5] sm:$0xff]
    %v50 = vld [vmem:[#allocation5 + $0x8] sm:$0xff]
    %v51 = vld [vmem:[#allocation5 + $0x10] sm:$0xff]
    %v52 = vld [vmem:[#allocation5 + $0x18] sm:$0xff]
    %v53 = vld [vmem:[#allocation5 + $0x20] sm:$0xff]
    %v54 = vld [vmem:[#allocation5 + $0x28] sm:$0xff]
    %v55 = vld [vmem:[#allocation5 + $0x30] sm:$0xff]
    %v56 = vld [vmem:[#allocation5 + $0x38] sm:$0xff]
    %v57 = vld [vmem:[#allocation5 + $0x40] sm:$0xff]
    %v58 = vld [vmem:[#allocation5 + $0x48] sm:$0xff]
    %v59 = vld [vmem:[#allocation5 + $0x50] sm:$0xff]
    %v60 = vld [vmem:[#allocation5 + $0x58] sm:$0xff]
    %v61 = vld [vmem:[#allocation5 + $0x60] sm:$0xff]
    %v62 = vld [vmem:[#allocation5 + $0x68] sm:$0xff]
    %v63 = vld [vmem:[#allocation5 + $0x70] sm:$0xff]
    %v64 = vld [vmem:[#allocation5 + $0x78] sm:$0xff]
    %65 = vmatpush.msra.mxu0 %v64
    %66 = vmatpush.msra.mxu0 %v63
    %67 = vmatpush.msra.mxu0 %v62
    %68 = vmatpush.msra.mxu0 %v61
    %69 = vmatpush.msra.mxu0 %v60
    %70 = vmatpush.msra.mxu0 %v59
    %71 = vmatpush.msra.mxu0 %v58
    %72 = vmatpush.msra.mxu0 %v57
    %73 = vmatpush.msra.mxu0 %v56
    %74 = vmatpush.msra.mxu0 %v55
    %75 = vmatpush.msra.mxu0 %v54
    %76 = vmatpush.msra.mxu0 %v53
    %77 = vmatpush.msra.mxu0 %v52
    %78 = vmatpush.msra.mxu0 %v51
    %79 = vmatpush.msra.mxu0 %v50
    %80 = vmatpush.msra.mxu0 %v49
    %81 = vmatmul.f32.gmra.mxu0 %v48
    %v82 = vpop.f32.mrf.mxu0
    %v83 = vadd.f32 0.0, %v82
    %84 = vdwg.mxu0
    %v85 = vadd.f32 %v47, %v83
    %86 = vst [vmem:[#allocation7] sm:$0xff] %v85
    // Predicated region
    $region22: #{tpu_custom_call.1} parent=1 // pred_check
      _
    $region23: #{tpu_custom_call.1} parent=1 // pred_check_branch
      %88 = sbr.rel (0) target = $region25
    $region24: #{tpu_custom_call.1} parent=1 // pred_region
      %90 = vsyncadd [#allocation4], 0
      %s92 = sshll.u32 [#allocation7], 4
      %s93 = int_to_ptr.vmem [resolvable:$true] %s92
      %s94 = sshll.u32 %s2, 4
      %s95 = int_to_ptr.hbm [resolvable:$true] %s94
      %97 = dma.vmem_to_hbm [thread:$0]  %s93, 128, %s95, [#allocation4]
    $region25: #{tpu_custom_call.1} parent=1 // pred_fallthru
      _
    // Predicated region
    $region26: #{tpu_custom_call.1} parent=1 // pred_check
      _
    $region27: #{tpu_custom_call.1} parent=1 // pred_check_branch
      %99 = sbr.rel (0) target = $region29
    $region28: #{tpu_custom_call.1} parent=1 // pred_region
      %101 = dma.done [#allocation4], 128
    $region29: #{tpu_custom_call.1} parent=1 // pred_fallthru
      _
    %102 = vsyncpa [#allocation3], 1
    %103 = vsyncpa [#allocation6], 1
    %104 = vsyncpa [#allocation4], 1

</llo_original>
